<compile_context>
chip_gen: v6e
topology: v6e:2x2x1
jax: 0.10.0
libtpu: 0.0.40
codegen_flags: <defaults>
</compile_context>

<pallas_src>
import functools

import jax
import jax.numpy as jnp
from jax.experimental import pallas as pl
from jax.experimental.pallas import tpu as pltpu


def _attention_kernel(num_hidden, hw_valid, bt, hwp, *refs):
    # refs = (x_ref, w0, b0, ..., w_logit, b_logit, out_ref, logits_scratch)
    x_ref = refs[0]
    param_refs = refs[1:-2]
    out_ref = refs[-2]
    logits_ref = refs[-1]

    # (C_in, Bt*HWp) bf16 slab: batch and spatial fused on the lane axis.
    h = x_ref[...]

    # Hidden 1x1 convs (channel-mixing matmuls, wide N) + bias + ReLU.
    for layer in range(num_hidden):
        w = param_refs[2 * layer][...]                 # (C_out, C_in) bf16
        b = param_refs[2 * layer + 1][...]             # (C_out, 1)    f32
        z = jnp.dot(w, h, preferred_element_type=jnp.float32) + b
        h = jnp.maximum(z, 0.0).astype(jnp.bfloat16)

    # Final 1x1 conv -> 1 channel over the full fused lane axis.
    wl = param_refs[-2][...]                           # (1, C_last) bf16
    bl = param_refs[-1][...]                           # (1, 1)      f32
    flat = jnp.dot(wl, h, preferred_element_type=jnp.float32) + bl  # (1, Bt*HWp)

    # Scatter each sample's logits into a dense (Bt, HWp) scratch so the
    # softmax runs sublane/lane dense (static, 128-aligned slices).
    for i in range(bt):
        logits_ref[pl.ds(i, 1), :] = flat[:, i * hwp:(i + 1) * hwp]

    logits = logits_ref[...]                           # (Bt, HWp) f32
    if hw_valid < hwp:
        lane = jax.lax.broadcasted_iota(jnp.int32, (bt, hwp), 1)
        logits = jnp.where(lane < hw_valid, logits, jnp.float32(-1e30))

    m = jnp.max(logits, axis=-1, keepdims=True)
    e = jnp.exp(logits - m)
    s = jnp.sum(e, axis=-1, keepdims=True)
    out_ref[...] = (e * pl.reciprocal(s, approx=False)).astype(out_ref.dtype)


def attention_forward(x_nchw, params, *, vmem_budget_bytes=8 * 1024 * 1024):
    """x_nchw: (B, C_in, H, W) float32.  params: list of (W, b) pairs, hidden
    layers first, final logit conv last.  Returns (B, 1, H, W) float32."""
    B, C_in, H, W = x_nchw.shape
    HW = H * W
    HWp = max(128, ((HW + 127) // 128) * 128)          # lane-dense last dim

    num_hidden = len(params) - 1                       # last pair = logit conv
    max_c = max([C_in] + [w.shape[0] for (w, _) in params])

    # Per-sample VMEM estimate (bytes): bf16 x (double-buffered), f32/bf16
    # intermediates, f32 output (double-buffered) + logits scratch + temps.
    per_sample = HWp * (4 * C_in + 12 * max_c + 16)
    cap = int(max(1, min(vmem_budget_bytes // per_sample, 32)))
    if B <= cap:
        Bt = B
    else:
        Bt = max(8, (cap // 8) * 8)                    # keep blocks 8-aligned
    B_pad = ((B + Bt - 1) // Bt) * Bt

    # Pad spatial to HWp and batch to B_pad, then fuse (batch, spatial) into
    # one big lane axis:  (C_in, B_pad * HWp), bf16 to halve HBM traffic.
    x = x_nchw.reshape(B, C_in, HW)
    if HWp != HW:
        x = jnp.pad(x, ((0, 0), (0, 0), (0, HWp - HW)))
    if B_pad != B:
        x = jnp.pad(x, ((0, B_pad - B), (0, 0), (0, 0)))
    x2d = jnp.transpose(x, (1, 0, 2)).reshape(C_in, B_pad * HWp)
    x2d = x2d.astype(jnp.bfloat16)

    # Weights in bf16 (MXU inputs), biases as f32 (C, 1) columns.
    flat_args = []
    flat_specs = []
    for (w, b) in params:
        wb = w.astype(jnp.bfloat16)
        bb = b.reshape(-1, 1).astype(jnp.float32)
        flat_args.extend([wb, bb])
        flat_specs.extend([
            pl.BlockSpec(wb.shape, lambda i: (0, 0)),
            pl.BlockSpec(bb.shape, lambda i: (0, 0)),
        ])

    Nt = Bt * HWp
    kernel = functools.partial(_attention_kernel, num_hidden, HW, Bt, HWp)

    out = pl.pallas_call(
        kernel,
        out_shape=jax.ShapeDtypeStruct((B_pad, HWp), jnp.float32),
        grid_spec=pltpu.PrefetchScalarGridSpec(
            num_scalar_prefetch=0,
            grid=(B_pad // Bt,),
            in_specs=[pl.BlockSpec((C_in, Nt), lambda i: (0, i))] + flat_specs,
            out_specs=pl.BlockSpec((Bt, HWp), lambda i: (i, 0)),
            scratch_shapes=[pltpu.VMEM((Bt, HWp), jnp.float32)],
        ),
        compiler_params=pltpu.CompilerParams(
            dimension_semantics=("parallel",)),
    )(x2d, *flat_args)

    return out[:B, :HW].reshape(B, 1, H, W)


def make_params(key, input_channel_num, channel_list):
    """Deterministic synthetic weights matching the PyTorch module shapes."""
    params = []
    prev = input_channel_num
    for c in channel_list:
        key, k1, k2 = jax.random.split(key, 3)
        w = jax.random.normal(k1, (c, prev), jnp.float32) * 0.3
        b = jax.random.normal(k2, (c,), jnp.float32) * 0.05
        params.append((w, b))
        prev = c
    key, k1, k2 = jax.random.split(key, 3)
    wl = jax.random.normal(k1, (1, prev), jnp.float32) * 0.3
    bl = jax.random.normal(k2, (1,), jnp.float32) * 0.05
    params.append((wl, bl))
    return params


def reference_forward(x_nchw, params):
    """Pure-JAX fp32 reference (same math, no Pallas)."""
    B, C, H, W = x_nchw.shape
    h = x_nchw.reshape(B, C, H * W)
    for (w, b) in params[:-1]:
        h = jnp.maximum(jnp.einsum("oc,bcn->bon", w, h) + b[None, :, None], 0.0)
    wl, bl = params[-1]
    logits = jnp.einsum("oc,bcn->bon", wl, h) + bl[None, :, None]
    probs = jax.nn.softmax(logits.reshape(B, -1), axis=1)
    return probs.reshape(B, 1, H, W)


def _check(x, params):
    out = jax.block_until_ready(attention_forward(x, params))
    ref = reference_forward(x, params)
    B, _, H, W = x.shape
    assert out.shape == (B, 1, H, W)
    # Softmax over each sample's map must sum to 1.
    assert jnp.allclose(out.reshape(B, -1).sum(axis=1), 1.0, atol=1e-4)
    # bf16 activations/weights with f32 accumulation vs fp32 reference.
    assert jnp.allclose(out, ref, atol=2e-4, rtol=8e-2)


if __name__ == "__main__":
    key = jax.random.PRNGKey(0)

    # Primary test: shapes implied by the module (B=2, C_in=4, 16x16).
    kx, kp, key = jax.random.split(key, 3)
    x = jax.random.normal(kx, (2, 4, 16, 16), jnp.float32)
    params = make_params(kp, 4, [8, 16])
    _check(x, params)

    # Secondary test: non-128-aligned H*W exercises the lane padding + mask.
    kx, kp, key = jax.random.split(key, 3)
    x2 = jax.random.normal(kx, (3, 4, 10, 10), jnp.float32)
    params2 = make_params(kp, 4, [8])
    _check(x2, params2)

    print("KERNEL_OK")
</pallas_src>

<mosaic_0001>
module attributes {stable_mosaic.version = 11 : i64} {
  func.func @_attention_kernel(%arg0: i32, %arg1: memref<4x512xbf16, #tpu.memory_space<vmem>>, %arg2: memref<8x4xbf16, #tpu.memory_space<vmem>>, %arg3: memref<8x1xf32, #tpu.memory_space<vmem>>, %arg4: memref<16x8xbf16, #tpu.memory_space<vmem>>, %arg5: memref<16x1xf32, #tpu.memory_space<vmem>>, %arg6: memref<1x16xbf16, #tpu.memory_space<vmem>>, %arg7: memref<1x1xf32, #tpu.memory_space<vmem>>, %arg8: memref<2x256xf32, #tpu.memory_space<vmem>>, %arg9: memref<2x256xf32, #tpu.memory_space<vmem>>) attributes {dimension_semantics = [#tpu.dimension_semantics<parallel>], iteration_bounds = array<i64: 1>, scalar_prefetch = 0 : i64, scratch_operands = 1 : i64, tpu.core_type = #tpu.core_type<tc>, window_params = [{transform_indices = @transform_0, window_bounds = array<i64: 4, 512>}, {pipeline_mode = #tpu.pipeline_mode<synchronous>, transform_indices = @transform_1, window_bounds = array<i64: 8, 4>}, {pipeline_mode = #tpu.pipeline_mode<synchronous>, transform_indices = @transform_2, window_bounds = array<i64: 8, 1>}, {pipeline_mode = #tpu.pipeline_mode<synchronous>, transform_indices = @transform_3, window_bounds = array<i64: 16, 8>}, {pipeline_mode = #tpu.pipeline_mode<synchronous>, transform_indices = @transform_4, window_bounds = array<i64: 16, 1>}, {pipeline_mode = #tpu.pipeline_mode<synchronous>, transform_indices = @transform_5, window_bounds = array<i64: 1, 16>}, {pipeline_mode = #tpu.pipeline_mode<synchronous>, transform_indices = @transform_6, window_bounds = array<i64: 1, 1>}, {transform_indices = @transform_7, window_bounds = array<i64: 2, 256>}]} {
    %c0 = arith.constant 0 : index
    %c0_0 = arith.constant 0 : index
    %0 = vector.load %arg1[%c0, %c0_0] : memref<4x512xbf16, #tpu.memory_space<vmem>>, vector<4x512xbf16>
    %c0_1 = arith.constant 0 : index
    %c0_2 = arith.constant 0 : index
    %1 = vector.load %arg2[%c0_1, %c0_2] : memref<8x4xbf16, #tpu.memory_space<vmem>>, vector<8x4xbf16>
    %c0_3 = arith.constant 0 : index
    %c0_4 = arith.constant 0 : index
    %2 = vector.load %arg3[%c0_3, %c0_4] : memref<8x1xf32, #tpu.memory_space<vmem>>, vector<8x1xf32>
    %cst = arith.constant dense<0.000000e+00> : vector<8x512xf32>
    %3 = tpu.matmul %1, %0, %cst {dimension_numbers = #tpu.dot_dimension_numbers<[1], [0], [0], [1], [0, 0, 1, 1], [], []>} : vector<8x4xbf16>, vector<4x512xbf16>, vector<8x512xf32> -> vector<8x512xf32>
    %4 = vector.broadcast %2 : vector<8x1xf32> to vector<8x512xf32>
    %5 = arith.addf %3, %4 : vector<8x512xf32>
    %cst_5 = arith.constant 0.000000e+00 : f32
    %6 = vector.broadcast %cst_5 : f32 to vector<8x512xf32>
    %7 = arith.maximumf %5, %6 : vector<8x512xf32>
    %8 = arith.truncf %7 : vector<8x512xf32> to vector<8x512xbf16>
    %c0_6 = arith.constant 0 : index
    %c0_7 = arith.constant 0 : index
    %9 = vector.load %arg4[%c0_6, %c0_7] : memref<16x8xbf16, #tpu.memory_space<vmem>>, vector<16x8xbf16>
    %c0_8 = arith.constant 0 : index
    %c0_9 = arith.constant 0 : index
    %10 = vector.load %arg5[%c0_8, %c0_9] : memref<16x1xf32, #tpu.memory_space<vmem>>, vector<16x1xf32>
    %cst_10 = arith.constant dense<0.000000e+00> : vector<16x512xf32>
    %11 = tpu.matmul %9, %8, %cst_10 {dimension_numbers = #tpu.dot_dimension_numbers<[1], [0], [0], [1], [0, 0, 1, 1], [], []>} : vector<16x8xbf16>, vector<8x512xbf16>, vector<16x512xf32> -> vector<16x512xf32>
    %12 = vector.broadcast %10 : vector<16x1xf32> to vector<16x512xf32>
    %13 = arith.addf %11, %12 : vector<16x512xf32>
    %cst_11 = arith.constant 0.000000e+00 : f32
    %14 = vector.broadcast %cst_11 : f32 to vector<16x512xf32>
    %15 = arith.maximumf %13, %14 : vector<16x512xf32>
    %16 = arith.truncf %15 : vector<16x512xf32> to vector<16x512xbf16>
    %c0_12 = arith.constant 0 : index
    %c0_13 = arith.constant 0 : index
    %17 = vector.load %arg6[%c0_12, %c0_13] : memref<1x16xbf16, #tpu.memory_space<vmem>>, vector<1x16xbf16>
    %c0_14 = arith.constant 0 : index
    %c0_15 = arith.constant 0 : index
    %18 = vector.load %arg7[%c0_14, %c0_15] : memref<1x1xf32, #tpu.memory_space<vmem>>, vector<1x1xf32>
    %cst_16 = arith.constant dense<0.000000e+00> : vector<1x512xf32>
    %19 = tpu.matmul %17, %16, %cst_16 {dimension_numbers = #tpu.dot_dimension_numbers<[1], [0], [0], [1], [0, 0, 1, 1], [], []>} : vector<1x16xbf16>, vector<16x512xbf16>, vector<1x512xf32> -> vector<1x512xf32>
    %20 = vector.broadcast %18 : vector<1x1xf32> to vector<1x512xf32>
    %21 = arith.addf %19, %20 : vector<1x512xf32>
    %22 = vector.extract_strided_slice %21 {offsets = [0, 0], sizes = [1, 256], strides = [1, 1]} : vector<1x512xf32> to vector<1x256xf32>
    %c0_17 = arith.constant 0 : index
    %c0_18 = arith.constant 0 : index
    %23 = vector.load %arg9[%c0_17, %c0_18] : memref<2x256xf32, #tpu.memory_space<vmem>>, vector<1x256xf32>
    tpu.vector_store %arg9[%c0_17, %c0_18], %22 {strides = array<i32>} : memref<2x256xf32, #tpu.memory_space<vmem>>, vector<1x256xf32>,
    %24 = vector.extract_strided_slice %21 {offsets = [0, 256], sizes = [1, 256], strides = [1, 1]} : vector<1x512xf32> to vector<1x256xf32>
    %c1 = arith.constant 1 : index
    %c0_19 = arith.constant 0 : index
    %25 = vector.load %arg9[%c1, %c0_19] : memref<2x256xf32, #tpu.memory_space<vmem>>, vector<1x256xf32>
    tpu.vector_store %arg9[%c1, %c0_19], %24 {strides = array<i32>} : memref<2x256xf32, #tpu.memory_space<vmem>>, vector<1x256xf32>,
    %c0_20 = arith.constant 0 : index
    %c0_21 = arith.constant 0 : index
    %26 = vector.load %arg9[%c0_20, %c0_21] : memref<2x256xf32, #tpu.memory_space<vmem>>, vector<2x256xf32>
    %cst_22 = arith.constant dense<0xFF800000> : vector<2xf32>
    %27 = vector.multi_reduction <maximumf>, %26, %cst_22 [1] : vector<2x256xf32> to vector<2xf32>
    %28 = vector.shape_cast %27 : vector<2xf32> to vector<2x1xf32>
    %29 = vector.broadcast %28 : vector<2x1xf32> to vector<2x256xf32>
    %30 = arith.subf %26, %29 : vector<2x256xf32>
    %31 = math.exp %30 : vector<2x256xf32>
    %cst_23 = arith.constant dense<0.000000e+00> : vector<2xf32>
    %32 = vector.multi_reduction <add>, %31, %cst_23 [1] : vector<2x256xf32> to vector<2xf32>
    %33 = vector.shape_cast %32 : vector<2xf32> to vector<2x1xf32>
    %34 = tpu.reciprocal %33 : vector<2x1xf32> -> vector<2x1xf32>
    %35 = vector.broadcast %34 : vector<2x1xf32> to vector<2x256xf32>
    %36 = arith.mulf %31, %35 : vector<2x256xf32>
    %c0_24 = arith.constant 0 : index
    %c0_25 = arith.constant 0 : index
    %37 = vector.load %arg8[%c0_24, %c0_25] : memref<2x256xf32, #tpu.memory_space<vmem>>, vector<2x256xf32>
    tpu.vector_store %arg8[%c0_24, %c0_25], %36 {strides = array<i32>} : memref<2x256xf32, #tpu.memory_space<vmem>>, vector<2x256xf32>,
    return
  }
  func.func @transform_0(%arg0: i32) -> (i32, i32) {
    %c0_i32 = arith.constant 0 : i32
    %c0_i32_0 = arith.constant 0 : i32
    return %c0_i32, %arg0 : i32, i32
  }
  func.func @transform_1(%arg0: i32) -> (i32, i32) {
    %c0_i32 = arith.constant 0 : i32
    %c0_i32_0 = arith.constant 0 : i32
    %c0_i32_1 = arith.constant 0 : i32
    return %c0_i32, %c0_i32_0 : i32, i32
  }
  func.func @transform_2(%arg0: i32) -> (i32, i32) {
    %c0_i32 = arith.constant 0 : i32
    %c0_i32_0 = arith.constant 0 : i32
    %c0_i32_1 = arith.constant 0 : i32
    return %c0_i32, %c0_i32_0 : i32, i32
  }
  func.func @transform_3(%arg0: i32) -> (i32, i32) {
    %c0_i32 = arith.constant 0 : i32
    %c0_i32_0 = arith.constant 0 : i32
    %c0_i32_1 = arith.constant 0 : i32
    return %c0_i32, %c0_i32_0 : i32, i32
  }
  func.func @transform_4(%arg0: i32) -> (i32, i32) {
    %c0_i32 = arith.constant 0 : i32
    %c0_i32_0 = arith.constant 0 : i32
    %c0_i32_1 = arith.constant 0 : i32
    return %c0_i32, %c0_i32_0 : i32, i32
  }
  func.func @transform_5(%arg0: i32) -> (i32, i32) {
    %c0_i32 = arith.constant 0 : i32
    %c0_i32_0 = arith.constant 0 : i32
    %c0_i32_1 = arith.constant 0 : i32
    return %c0_i32, %c0_i32_0 : i32, i32
  }
  func.func @transform_6(%arg0: i32) -> (i32, i32) {
    %c0_i32 = arith.constant 0 : i32
    %c0_i32_0 = arith.constant 0 : i32
    %c0_i32_1 = arith.constant 0 : i32
    return %c0_i32, %c0_i32_0 : i32, i32
  }
  func.func @transform_7(%arg0: i32) -> (i32, i32) {
    %c0_i32 = arith.constant 0 : i32
    %c0_i32_0 = arith.constant 0 : i32
    return %arg0, %c0_i32 : i32, i32
  }
}

</mosaic_0001>

<llo_original>
// kernel: tpu_custom_call.1
$region0: #{tpu_custom_call.1}
  #allocation0 [shape = 'u32[]', space=smem, size = 0x4, offset = 0x4, fixed_abs, tag = 'smem constant byte address 0x4 - core index']
  #allocation1 [shape = 'u32[144,128]{1,0:T(1,128)}', space=vmem, size = 0x12000, scoped, tag = 'internal scratch']
  #allocation2 [shape = 'f32[2,256]{1,0:T(2,128)}', space=vmem, size = 0x800, scoped, tag = 'scratch operand']
  #allocation3 [shape = 'f32[1,1]{1,0:T(1,128)S(1)}', space=vmem, size = 0x200, scoped, tag = 'scoped memory for tpu_custom_call.1']
  %s0 = inlined_call_operand.vmem [shape: bf16[4,512], index: 0, kind: input, shape index: {}]
  %s1 = inlined_call_operand.vmem [shape: bf16[8,4], index: 1, kind: input, shape index: {}]
  %s2 = inlined_call_operand.vmem [shape: f32[8,1], index: 2, kind: input, shape index: {}]
  %s3 = inlined_call_operand.vmem [shape: bf16[16,8], index: 3, kind: input, shape index: {}]
  %s4 = inlined_call_operand.vmem [shape: f32[16,1], index: 4, kind: input, shape index: {}]
  %s5 = inlined_call_operand.vmem [shape: bf16[1,16], index: 5, kind: input, shape index: {}]
  %s6 = inlined_call_operand.<no memory space> [shape: f32[1,1], index: 6, kind: input, shape index: {}]
  %s7 = inlined_call_operand.hbm [shape: f32[2,256], index: 7, kind: output, shape index: {}]
  %s8 = sld [smem:[#allocation0]]
  $region38: #{tpu_custom_call.1} parent=0
    _
  %s10 = ssub.s32 1, %s8
  %s11 = scalar_select 0, %s10, %s8
  %v12 = vstv %s6
  %13 = vst [vmem:[#allocation3] sm:$0x1] %v12
  $region1: #{tpu_custom_call.1} parent=0
    #allocation4 [shape = 'u8[2048]{0}', space=vmem, size = 0x800, scoped, tag = 'output window, operand 0, single buffered']
    #allocation5 [shape = 's32[1]{0}', space=sflag, size = 0x4, scoped, tag = 'scoped memory for tpu_custom_call.1']
    %14 = vsyncpa [#allocation5], 0
    // Predicated region
    $region2: #{tpu_custom_call.1} parent=1 // pred_check
      _
    $region3: #{tpu_custom_call.1} parent=1 // pred_check_branch
      %16 = sbr.rel (0) target = $region5
    $region4: #{tpu_custom_call.1} parent=1 // pred_region
      _
    $region5: #{tpu_custom_call.1} parent=1 // pred_fallthru
      _
    // Predicated region
    $region6: #{tpu_custom_call.1} parent=1 // pred_check
      _
    $region7: #{tpu_custom_call.1} parent=1 // pred_check_branch
      %18 = sbr.rel (0) target = $region9
    $region8: #{tpu_custom_call.1} parent=1 // pred_region
      _
    $region9: #{tpu_custom_call.1} parent=1 // pred_fallthru
      _
    // Predicated region
    $region10: #{tpu_custom_call.1} parent=1 // pred_check
      _
    $region11: #{tpu_custom_call.1} parent=1 // pred_check_branch
      %20 = sbr.rel (0) target = $region13
    $region12: #{tpu_custom_call.1} parent=1 // pred_region
      _
    $region13: #{tpu_custom_call.1} parent=1 // pred_fallthru
      _
    // Predicated region
    $region14: #{tpu_custom_call.1} parent=1 // pred_check
      _
    $region15: #{tpu_custom_call.1} parent=1 // pred_check_branch
      %22 = sbr.rel (0) target = $region17
    $region16: #{tpu_custom_call.1} parent=1 // pred_region
      _
    $region17: #{tpu_custom_call.1} parent=1 // pred_fallthru
      _
    // Predicated region
    $region18: #{tpu_custom_call.1} parent=1 // pred_check
      _
    $region19: #{tpu_custom_call.1} parent=1 // pred_check_branch
      %24 = sbr.rel (0) target = $region21
    $region20: #{tpu_custom_call.1} parent=1 // pred_region
      _
    $region21: #{tpu_custom_call.1} parent=1 // pred_fallthru
      _
    // Predicated region
    $region22: #{tpu_custom_call.1} parent=1 // pred_check
      _
    $region23: #{tpu_custom_call.1} parent=1 // pred_check_branch
      %26 = sbr.rel (0) target = $region25
    $region24: #{tpu_custom_call.1} parent=1 // pred_region
      _
    $region25: #{tpu_custom_call.1} parent=1 // pred_fallthru
      _
    // Predicated region
    $region26: #{tpu_custom_call.1} parent=1 // pred_check
      _
    $region27: #{tpu_custom_call.1} parent=1 // pred_check_branch
      %28 = sbr.rel (0) target = $region29
    $region28: #{tpu_custom_call.1} parent=1 // pred_region
      _
    $region29: #{tpu_custom_call.1} parent=1 // pred_fallthru
      _
    %v30 = vld [vmem:[%s0] sm:$0xff]
    %v31 = vld [vmem:[%s1] sm:$0xf]
    %v32 = vld [vmem:[%s2] sm:$0xff]
    %34 = vset.pattern.permute.xlu0 0
    %35 = vperm.xlu0 %34, %v32
    %v36 = vpop.permute.xlu0 %35
    %v39 = vcombine.high %v30, %v30
    %v41 = vunpack.c.l.s4 1983009808
    %v42 = vunpack.c.0.s8 %v41
    %v43 = vlaneseq
    %v44 = vshrl.u32 %v43, 7
    %v45 = vsub.s32 %v42, %v44
    %v46 = vrot.slane %v30, %v45
    %v48 = vunpack.c.l.s4 1983009808
    %v49 = vunpack.c.0.s8 %v48
    %v50 = vlaneseq
    %v51 = vshrl.u32 %v50, 7
    %v52 = vsub.s32 %v49, %v51
    %v53 = vrot.slane %v39, %v52
    %v54 = vcombine.high %v46, %v46
    %v55 = vcombine.high %v53, %v53
    %vm56 = vcmask 31744
    %v58 = vsel %vm56, %v31, 0
    %vm60 = vcmask 1041408
    %v62 = vsel %vm60, %v46, 0
    %v65 = vsel %vm60, %v54, 0
    %v68 = vsel %vm60, %v53, 0
    %v71 = vsel %vm60, %v55, 0
    %73 = vmatprep.subr.bf16.mxu0 0
    %74 = vmatpush1.bf16.msra.mxu0 0
    %75 = vmatprep.subr.bf16.mxu0 0
    %76 = vmatpush1.bf16.msra.mxu0 0
    %77 = vmatprep.subr.bf16.mxu0 0
    %78 = vmatpush1.bf16.msra.mxu0 0
    %79 = vmatprep.subr.bf16.mxu0 0
    %80 = vmatpush1.bf16.msra.mxu0 0
    %81 = vmatprep.subr.bf16.mxu0 0
    %82 = vmatpush1.bf16.msra.mxu0 0
    %83 = vmatprep.subr.bf16.mxu0 0
    %84 = vmatpush1.bf16.msra.mxu0 0
    %85 = vmatprep.subr.bf16.mxu0 0
    %86 = vmatpush1.bf16.msra.mxu0 0
    %87 = vmatprep.subr.bf16.mxu0 %v65
    %88 = vmatpush1.bf16.msra.mxu0 %v62
    %89 = vmatprep.subr.bf16.mxu0 0
    %90 = vmatpush2.bf16.msra.mxu0 0
    %91 = vmatprep.subr.bf16.mxu0 0
    %92 = vmatpush2.bf16.msra.mxu0 0
    %93 = vmatprep.subr.bf16.mxu0 0
    %94 = vmatpush2.bf16.msra.mxu0 0
    %95 = vmatprep.subr.bf16.mxu0 0
    %96 = vmatpush2.bf16.msra.mxu0 0
    %97 = vmatprep.subr.bf16.mxu0 0
    %98 = vmatpush2.bf16.msra.mxu0 0
    %99 = vmatprep.subr.bf16.mxu0 0
    %100 = vmatpush2.bf16.msra.mxu0 0
    %101 = vmatprep.subr.bf16.mxu0 0
    %102 = vmatpush2.bf16.msra.mxu0 0
    %103 = vmatprep.subr.bf16.mxu0 0
    %104 = vmatpush2.bf16.msra.mxu0 0
    %105 = vmatprep.mubr.bf16.mxu0 0
    %106 = vmatmul.mubr.bf16.gmra.mxu0 %v58
    %v107 = vpop.f32.mrf.mxu0
    %v108 = vadd.f32 %v36, %v107
    %v109 = vpop.f32.mrf.mxu0
    %v110 = vadd.f32 %v36, %v109
    %v111 = vpop.f32.mrf.mxu0
    %v112 = vpop.f32.mrf.mxu0
    %113 = vdwg.mxu0
    %114 = vmatprep.subr.bf16.mxu0 0
    %115 = vmatpush1.bf16.msra.mxu0 0
    %116 = vmatprep.subr.bf16.mxu0 0
    %117 = vmatpush1.bf16.msra.mxu0 0
    %118 = vmatprep.subr.bf16.mxu0 0
    %119 = vmatpush1.bf16.msra.mxu0 0
    %120 = vmatprep.subr.bf16.mxu0 0
    %121 = vmatpush1.bf16.msra.mxu0 0
    %122 = vmatprep.subr.bf16.mxu0 0
    %123 = vmatpush1.bf16.msra.mxu0 0
    %124 = vmatprep.subr.bf16.mxu0 0
    %125 = vmatpush1.bf16.msra.mxu0 0
    %126 = vmatprep.subr.bf16.mxu0 0
    %127 = vmatpush1.bf16.msra.mxu0 0
    %128 = vmatprep.subr.bf16.mxu0 %v71
    %129 = vmatpush1.bf16.msra.mxu0 %v68
    %130 = vmatprep.subr.bf16.mxu0 0
    %131 = vmatpush2.bf16.msra.mxu0 0
    %132 = vmatprep.subr.bf16.mxu0 0
    %133 = vmatpush2.bf16.msra.mxu0 0
    %134 = vmatprep.subr.bf16.mxu0 0
    %135 = vmatpush2.bf16.msra.mxu0 0
    %136 = vmatprep.subr.bf16.mxu0 0
    %137 = vmatpush2.bf16.msra.mxu0 0
    %138 = vmatprep.subr.bf16.mxu0 0
    %139 = vmatpush2.bf16.msra.mxu0 0
    %140 = vmatprep.subr.bf16.mxu0 0
    %141 = vmatpush2.bf16.msra.mxu0 0
    %142 = vmatprep.subr.bf16.mxu0 0
    %143 = vmatpush2.bf16.msra.mxu0 0
    %144 = vmatprep.subr.bf16.mxu0 0
    %145 = vmatpush2.bf16.msra.mxu0 0
    %146 = vmatprep.mubr.bf16.mxu0 0
    %147 = vmatmul.mubr.bf16.gmra.mxu0 %v58
    %v148 = vpop.f32.mrf.mxu0
    %v149 = vadd.f32 %v36, %v148
    %v150 = vpop.f32.mrf.mxu0
    %v151 = vadd.f32 %v36, %v150
    %v152 = vpop.f32.mrf.mxu0
    %v153 = vpop.f32.mrf.mxu0
    %154 = vdwg.mxu0
    %v155 = vmax.f32 %v108, 0.0
    %v156 = vmax.f32 %v110, 0.0
    %v157 = vmax.f32 %v149, 0.0
    %v158 = vmax.f32 %v151, 0.0
    %v159 = vpack.c.bf16 %v155, %v155
    %v160 = vpack.c.bf16 %v156, %v156
    %v161 = vpack.c.bf16 %v157, %v157
    %v162 = vpack.c.bf16 %v158, %v158
    %v163 = vld [vmem:[%s3] sm:$0xf]
    %v164 = vld [vmem:[%s3 + $0x4] sm:$0xf]
    %v165 = vld [vmem:[%s4] sm:$0xff]
    %v166 = vld [vmem:[%s4 + $0x8] sm:$0xff]
    %168 = vset.pattern.permute.xlu0 0
    %169 = vperm.xlu0 %168, %v165
    %v170 = vpop.permute.xlu0 %169
    %173 = vset.pattern.permute.xlu0 0
    %174 = vperm.xlu0 %173, %v166
    %v175 = vpop.permute.xlu0 %174
    %v179 = vunpack.c.l.b16 %v163
    %v180 = vunpack.c.l.b16 %v164
    %v181 = vpack.c.b16 %v180, %v179
    %vm182 = vcmask 64512
    %v184 = vsel %vm182, %v181, 0
    %vm186 = vcmask 1043456
    %v188 = vsel %vm186, %v159, 0
    %v191 = vsel %vm186, %v160, 0
    %v194 = vsel %vm186, %v161, 0
    %v197 = vsel %vm186, %v162, 0
    %199 = vmatprep.subr.bf16.mxu0 0
    %200 = vmatpush1.bf16.msra.mxu0 0
    %201 = vmatprep.subr.bf16.mxu0 0
    %202 = vmatpush1.bf16.msra.mxu0 0
    %203 = vmatprep.subr.bf16.mxu0 0
    %204 = vmatpush1.bf16.msra.mxu0 0
    %205 = vmatprep.subr.bf16.mxu0 0
    %206 = vmatpush1.bf16.msra.mxu0 0
    %207 = vmatprep.subr.bf16.mxu0 0
    %208 = vmatpush1.bf16.msra.mxu0 0
    %209 = vmatprep.subr.bf16.mxu0 0
    %210 = vmatpush1.bf16.msra.mxu0 0
    %211 = vmatprep.subr.bf16.mxu0 0
    %212 = vmatpush1.bf16.msra.mxu0 0
    %213 = vmatprep.subr.bf16.mxu0 %v191
    %214 = vmatpush1.bf16.msra.mxu0 %v188
    %215 = vmatprep.subr.bf16.mxu0 0
    %216 = vmatpush2.bf16.msra.mxu0 0
    %217 = vmatprep.subr.bf16.mxu0 0
    %218 = vmatpush2.bf16.msra.mxu0 0
    %219 = vmatprep.subr.bf16.mxu0 0
    %220 = vmatpush2.bf16.msra.mxu0 0
    %221 = vmatprep.subr.bf16.mxu0 0
    %222 = vmatpush2.bf16.msra.mxu0 0
    %223 = vmatprep.subr.bf16.mxu0 0
    %224 = vmatpush2.bf16.msra.mxu0 0
    %225 = vmatprep.subr.bf16.mxu0 0
    %226 = vmatpush2.bf16.msra.mxu0 0
    %227 = vmatprep.subr.bf16.mxu0 0
    %228 = vmatpush2.bf16.msra.mxu0 0
    %229 = vmatprep.subr.bf16.mxu0 0
    %230 = vmatpush2.bf16.msra.mxu0 0
    %231 = vmatprep.mubr.bf16.mxu0 0
    %232 = vmatmul.mubr.bf16.gmra.mxu0 %v184
    %v233 = vpop.f32.mrf.mxu0
    %v234 = vadd.f32 %v170, %v233
    %v235 = vpop.f32.mrf.mxu0
    %v236 = vadd.f32 %v170, %v235
    %v237 = vpop.f32.mrf.mxu0
    %v238 = vadd.f32 %v175, %v237
    %v239 = vpop.f32.mrf.mxu0
    %v240 = vadd.f32 %v175, %v239
    %241 = vdwg.mxu0
    %242 = vmatprep.subr.bf16.mxu0 0
    %243 = vmatpush1.bf16.msra.mxu0 0
    %244 = vmatprep.subr.bf16.mxu0 0
    %245 = vmatpush1.bf16.msra.mxu0 0
    %246 = vmatprep.subr.bf16.mxu0 0
    %247 = vmatpush1.bf16.msra.mxu0 0
    %248 = vmatprep.subr.bf16.mxu0 0
    %249 = vmatpush1.bf16.msra.mxu0 0
    %250 = vmatprep.subr.bf16.mxu0 0
    %251 = vmatpush1.bf16.msra.mxu0 0
    %252 = vmatprep.subr.bf16.mxu0 0
    %253 = vmatpush1.bf16.msra.mxu0 0
    %254 = vmatprep.subr.bf16.mxu0 0
    %255 = vmatpush1.bf16.msra.mxu0 0
    %256 = vmatprep.subr.bf16.mxu0 %v197
    %257 = vmatpush1.bf16.msra.mxu0 %v194
    %258 = vmatprep.subr.bf16.mxu0 0
    %259 = vmatpush2.bf16.msra.mxu0 0
    %260 = vmatprep.subr.bf16.mxu0 0
    %261 = vmatpush2.bf16.msra.mxu0 0
    %262 = vmatprep.subr.bf16.mxu0 0
    %263 = vmatpush2.bf16.msra.mxu0 0
    %264 = vmatprep.subr.bf16.mxu0 0
    %265 = vmatpush2.bf16.msra.mxu0 0
    %266 = vmatprep.subr.bf16.mxu0 0
    %267 = vmatpush2.bf16.msra.mxu0 0
    %268 = vmatprep.subr.bf16.mxu0 0
    %269 = vmatpush2.bf16.msra.mxu0 0
    %270 = vmatprep.subr.bf16.mxu0 0
    %271 = vmatpush2.bf16.msra.mxu0 0
    %272 = vmatprep.subr.bf16.mxu0 0
    %273 = vmatpush2.bf16.msra.mxu0 0
    %274 = vmatprep.mubr.bf16.mxu0 0
    %275 = vmatmul.mubr.bf16.gmra.mxu0 %v184
    %v276 = vpop.f32.mrf.mxu0
    %v277 = vadd.f32 %v170, %v276
    %v278 = vpop.f32.mrf.mxu0
    %v279 = vadd.f32 %v170, %v278
    %v280 = vpop.f32.mrf.mxu0
    %v281 = vadd.f32 %v175, %v280
    %v282 = vpop.f32.mrf.mxu0
    %v283 = vadd.f32 %v175, %v282
    %284 = vdwg.mxu0
    %v285 = vmax.f32 %v234, 0.0
    %v286 = vmax.f32 %v236, 0.0
    %v287 = vmax.f32 %v277, 0.0
    %v288 = vmax.f32 %v279, 0.0
    %v289 = vmax.f32 %v238, 0.0
    %v290 = vmax.f32 %v240, 0.0
    %v291 = vmax.f32 %v281, 0.0
    %v292 = vmax.f32 %v283, 0.0
    %v293 = vpack.c.bf16 %v289, %v285
    %v294 = vpack.c.bf16 %v290, %v286
    %v295 = vpack.c.bf16 %v291, %v287
    %v296 = vpack.c.bf16 %v292, %v288
    %v297 = vld [vmem:[%s5] sm:$0x1]
    %v298 = vld [vmem:[#allocation3] sm:$0x1]
    %300 = vset.pattern.permute.xlu0 0
    %301 = vperm.xlu0 %300, %v298
    %v302 = vpop.permute.xlu0 %301
    %v304 = vlaneseq
    %v305 = vshrl.u32 %v304, 7
    %v306 = vsub.s32 0, %v305
    %v307 = vrot.slane %v302, %v306
    %vm308 = vcmask 130048
    %v310 = vsel %vm308, %v297, 0
    %312 = vmatprep.subr.bf16.mxu0 0
    %313 = vmatpush1.bf16.msra.mxu0 0
    %314 = vmatprep.subr.bf16.mxu0 0
    %315 = vmatpush1.bf16.msra.mxu0 0
    %316 = vmatprep.subr.bf16.mxu0 0
    %317 = vmatpush1.bf16.msra.mxu0 0
    %318 = vmatprep.subr.bf16.mxu0 0
    %319 = vmatpush1.bf16.msra.mxu0 0
    %320 = vmatprep.subr.bf16.mxu0 0
    %321 = vmatpush1.bf16.msra.mxu0 0
    %322 = vmatprep.subr.bf16.mxu0 0
    %323 = vmatpush1.bf16.msra.mxu0 0
    %324 = vmatprep.subr.bf16.mxu0 0
    %325 = vmatpush1.bf16.msra.mxu0 0
    %326 = vmatprep.subr.bf16.mxu0 %v294
    %327 = vmatpush1.bf16.msra.mxu0 %v293
    %328 = vmatprep.subr.bf16.mxu0 0
    %329 = vmatpush2.bf16.msra.mxu0 0
    %330 = vmatprep.subr.bf16.mxu0 0
    %331 = vmatpush2.bf16.msra.mxu0 0
    %332 = vmatprep.subr.bf16.mxu0 0
    %333 = vmatpush2.bf16.msra.mxu0 0
    %334 = vmatprep.subr.bf16.mxu0 0
    %335 = vmatpush2.bf16.msra.mxu0 0
    %336 = vmatprep.subr.bf16.mxu0 0
    %337 = vmatpush2.bf16.msra.mxu0 0
    %338 = vmatprep.subr.bf16.mxu0 0
    %339 = vmatpush2.bf16.msra.mxu0 0
    %340 = vmatprep.subr.bf16.mxu0 0
    %341 = vmatpush2.bf16.msra.mxu0 0
    %342 = vmatprep.subr.bf16.mxu0 0
    %343 = vmatpush2.bf16.msra.mxu0 0
    %344 = vmatprep.mubr.bf16.mxu0 0
    %345 = vmatmul.mubr.bf16.gmra.mxu0 %v310
    %v346 = vpop.f32.mrf.mxu0
    %v347 = vadd.f32 %v307, %v346
    %v348 = vpop.f32.mrf.mxu0
    %v349 = vadd.f32 %v307, %v348
    %v350 = vpop.f32.mrf.mxu0
    %v351 = vpop.f32.mrf.mxu0
    %352 = vdwg.mxu0
    %353 = vmatprep.subr.bf16.mxu0 0
    %354 = vmatpush1.bf16.msra.mxu0 0
    %355 = vmatprep.subr.bf16.mxu0 0
    %356 = vmatpush1.bf16.msra.mxu0 0
    %357 = vmatprep.subr.bf16.mxu0 0
    %358 = vmatpush1.bf16.msra.mxu0 0
    %359 = vmatprep.subr.bf16.mxu0 0
    %360 = vmatpush1.bf16.msra.mxu0 0
    %361 = vmatprep.subr.bf16.mxu0 0
    %362 = vmatpush1.bf16.msra.mxu0 0
    %363 = vmatprep.subr.bf16.mxu0 0
    %364 = vmatpush1.bf16.msra.mxu0 0
    %365 = vmatprep.subr.bf16.mxu0 0
    %366 = vmatpush1.bf16.msra.mxu0 0
    %367 = vmatprep.subr.bf16.mxu0 %v296
    %368 = vmatpush1.bf16.msra.mxu0 %v295
    %369 = vmatprep.subr.bf16.mxu0 0
    %370 = vmatpush2.bf16.msra.mxu0 0
    %371 = vmatprep.subr.bf16.mxu0 0
    %372 = vmatpush2.bf16.msra.mxu0 0
    %373 = vmatprep.subr.bf16.mxu0 0
    %374 = vmatpush2.bf16.msra.mxu0 0
    %375 = vmatprep.subr.bf16.mxu0 0
    %376 = vmatpush2.bf16.msra.mxu0 0
    %377 = vmatprep.subr.bf16.mxu0 0
    %378 = vmatpush2.bf16.msra.mxu0 0
    %379 = vmatprep.subr.bf16.mxu0 0
    %380 = vmatpush2.bf16.msra.mxu0 0
    %381 = vmatprep.subr.bf16.mxu0 0
    %382 = vmatpush2.bf16.msra.mxu0 0
    %383 = vmatprep.subr.bf16.mxu0 0
    %384 = vmatpush2.bf16.msra.mxu0 0
    %385 = vmatprep.mubr.bf16.mxu0 0
    %386 = vmatmul.mubr.bf16.gmra.mxu0 %v310
    %v387 = vpop.f32.mrf.mxu0
    %v388 = vadd.f32 %v307, %v387
    %v389 = vpop.f32.mrf.mxu0
    %v390 = vadd.f32 %v307, %v389
    %v391 = vpop.f32.mrf.mxu0
    %v392 = vpop.f32.mrf.mxu0
    %393 = vdwg.mxu0
    %v396 = vcombine.low %v347, %v349
    %v398 = vunpack.c.l.s4 1966171168
    %v399 = vunpack.c.0.s8 %v398
    %v400 = vlaneseq
    %v401 = vshrl.u32 %v400, 7
    %v402 = vsub.s32 %v399, %v401
    %v403 = vrot.slane %v396, %v402
    %v405 = vunpack.c.l.s4 1966171168
    %v406 = vunpack.c.0.s8 %v405
    %v407 = vlaneseq
    %v408 = vshrl.u32 %v407, 7
    %v409 = vsub.s32 %v406, %v408
    %v410 = vrot.slane %v403, %v409
    %v412 = vlaneseq
    %vm413 = vcmp.ge.s32.totalorder %v412, 0
    %vm414 = vcmp.lt.s32.totalorder %v412, 256
    %vm415 = vmand %vm413, %vm414
    %416 = vst.msk [vmem:[#allocation2] ss:$2 sm:$0x3] %vm415, %v410
    %v419 = vcombine.low %v388, %v390
    %v421 = vunpack.c.l.s4 1966171168
    %v422 = vunpack.c.0.s8 %v421
    %v423 = vlaneseq
    %v424 = vshrl.u32 %v423, 7
    %v425 = vsub.s32 %v422, %v424
    %v426 = vrot.slane %v419, %v425
    %v428 = vunpack.c.l.s4 1966171168
    %v429 = vunpack.c.0.s8 %v428
    %v430 = vlaneseq
    %v431 = vshrl.u32 %v430, 7
    %v432 = vsub.s32 %v429, %v431
    %v433 = vrot.slane %v426, %v432
    %s435 = scalar_lea.vmem [#allocation2], 1
    %436 = vst.msk [vmem:[%s435] ss:$2 sm:$0x3] %vm415, %v433
    %v437 = vld [vmem:[#allocation2] sm:$0xf]
    %v440 = vunpack.c.l.s4 1983009808
    %v441 = vunpack.c.0.s8 %v440
    %v442 = vlaneseq
    %v443 = vshrl.u32 %v442, 7
    %v444 = vsub.s32 %v441, %v443
    %v445 = vrot.slane %v437, %v444
    %v446 = vcombine.high %v445, %v445
    %v449 = vsel %vm60, %v445, -inf
    %v450 = vsel %vm60, %v446, -inf
    %v451 = vmax.f32 %v449, %v450
    %452 = vmax.xlane.f32.xlu0 %v451
    %v453 = vpop.xlane.xlu0 %452
    %v456 = vunpack.c.l.s4 269488144
    %v457 = vunpack.c.0.s8 %v456
    %v458 = vlaneseq
    %v459 = vshrl.u32 %v458, 7
    %v460 = vsub.s32 %v457, %v459
    %v461 = vrot.slane %v453, %v460
    %v463 = vsub.f32 %v437, %v461
    %v464 = vmul.f32 %v463, 1.442695
    %v465 = vpow.pop %v464
    %v468 = vunpack.c.l.s4 1983009808
    %v469 = vunpack.c.0.s8 %v468
    %v470 = vlaneseq
    %v471 = vshrl.u32 %v470, 7
    %v472 = vsub.s32 %v469, %v471
    %v473 = vrot.slane %v465, %v472
    %v474 = vcombine.high %v473, %v473
    %v477 = vsel %vm60, %v473, 0.0
    %v478 = vsel %vm60, %v474, 0.0
    %v479 = vadd.f32 %v477, %v478
    %480 = vadd.xlane.f32.xlu0 %v479
    %v481 = vpop.xlane.xlu0 %480
    %v482 = vrcp.pop %v481
    %v485 = vunpack.c.l.s4 269488144
    %v486 = vunpack.c.0.s8 %v485
    %v487 = vlaneseq
    %v488 = vshrl.u32 %v487, 7
    %v489 = vsub.s32 %v486, %v488
    %v490 = vrot.slane %v482, %v489
    %v492 = vmul.f32 %v465, %v490
    %493 = vst [vmem:[#allocation4] sm:$0xf] %v492
    // Predicated region
    $region30: #{tpu_custom_call.1} parent=1 // pred_check
      _
    $region31: #{tpu_custom_call.1} parent=1 // pred_check_branch
      %495 = sbr.rel (0) target = $region33
    $region32: #{tpu_custom_call.1} parent=1 // pred_region
      %s497 = ssub.s32 64, 64
      %498 = vsyncadd [#allocation5], %s497
      %s500 = sshll.u32 [#allocation4], 4
      %s501 = int_to_ptr.vmem [resolvable:$true] %s500
      %503 = dma.vmem_to_hbm [thread:$0]  %s501, 64, %s7, [#allocation5]
    $region33: #{tpu_custom_call.1} parent=1 // pred_fallthru
      _
    // Predicated region
    $region34: #{tpu_custom_call.1} parent=1 // pred_check
      _
    $region35: #{tpu_custom_call.1} parent=1 // pred_check_branch
      %505 = sbr.rel (0) target = $region37
    $region36: #{tpu_custom_call.1} parent=1 // pred_region
      %506 = dma.done [#allocation5], 64
    $region37: #{tpu_custom_call.1} parent=1 // pred_fallthru
      _
    %507 = vsyncpa [#allocation5], 1

</llo_original>
